<compile_context>
chip_gen: v7x
topology: tpu7x:2x2x1
jax: 0.10.0
libtpu: 0.0.40
codegen_flags: <defaults>
</compile_context>

<pallas_src>
import functools

import jax
import jax.numpy as jnp
from jax.experimental import pallas as pl
from jax.experimental.pallas import tpu as pltpu


def _focal_loss_kernel(x_ref, y_ref, o_ref, *, gamma, total_n, block_n, int_gamma):
    i = pl.program_id(0)

    x = x_ref[...].astype(jnp.float32)          # (TN, C)
    y = y_ref[...]                              # (TN, 1) int32

    # Row-validity mask for the (possibly padded) last tile. Zero the padded rows of
    # x so every intermediate stays finite; their loss is masked to 0 below.
    row = jax.lax.broadcasted_iota(jnp.int32, (block_n, 1), 0)
    valid = (i * block_n + row) < total_n       # (TN, 1) bool
    x = jnp.where(valid, x, 0.0)

    # Numerically stable softmax pieces along the class (lane) axis.
    # Reuse exp(z): no explicit log_p tile, no second exp for pt.
    m = jnp.max(x, axis=-1, keepdims=True)
    z = x - m
    e = jnp.exp(z)
    sumexp = jnp.sum(e, axis=-1, keepdims=True)
    lse = jnp.log(sumexp)

    # One-hot select of the label column (vectorized, no gather/scatter).
    col = jax.lax.broadcasted_iota(jnp.int32, z.shape, 1)
    onehot = col == y                           # (TN, C) bool
    z_y = jnp.sum(jnp.where(onehot, z, 0.0), axis=-1, keepdims=True)   # (TN, 1)
    e_y = jnp.sum(jnp.where(onehot, e, 0.0), axis=-1, keepdims=True)   # (TN, 1)

    ce = lse - z_y                              # = -log_pt  (NLLLoss, reduction='none')
    pt = e_y * pl.reciprocal(sumexp, approx=True)
    fm = jnp.maximum(1.0 - pt, 0.0)             # clamp tiny negatives from approx recip

    if int_gamma is not None:
        # Integer gamma: repeated VPU multiplies (avoids exp/log pow on the EUP).
        focal = jnp.ones_like(fm)
        for _ in range(int_gamma):
            focal = focal * fm
    else:
        focal = fm ** jnp.float32(gamma)

    loss = focal * ce * valid.astype(jnp.float32)   # (TN, 1)
    tile_sum = jnp.sum(loss)

    # Per-tile partial sum, written to a lane-dense block; reduced in the wrapper.
    o_ref[...] = jnp.broadcast_to(tile_sum, o_ref.shape).astype(jnp.float32)


class MultiClassFocalLoss:
    """Pallas TPU implementation of the reference MultiCalssFocalLoss forward."""

    def __init__(self, alpha=1, gamma=2):
        self.alpha = alpha   # unused in forward (matches the PyTorch reference)
        self.gamma = gamma

    def __call__(self, x, y, *, x_tile_budget_bytes=8 * 1024 * 1024):
        n, c = x.shape
        y2 = y.astype(jnp.int32).reshape(n, 1)

        # Choose block_n: fill the pipeline (multi-MiB tiles) while keeping the
        # double-buffered f32 x tile within the budget (safe for v7x's 64 MiB VMEM).
        bn = x_tile_budget_bytes // (2 * c * 4)
        bn = max(8, min(int(bn), 4096))
        if n >= 8:
            bn = min(bn, (n // 8) * 8)          # don't exceed N
        bn = max(8, (bn // 8) * 8)              # sublane-aligned
        grid_n = pl.cdiv(n, bn)

        gamma_f = float(self.gamma)
        int_gamma = (
            int(gamma_f) if (gamma_f.is_integer() and 0 <= gamma_f <= 8) else None
        )

        kernel = functools.partial(
            _focal_loss_kernel,
            gamma=gamma_f,
            total_n=n,
            block_n=bn,
            int_gamma=int_gamma,
        )

        # 2x (double-buffered) x tile + y tile + output + slack.
        x_tile_bytes = bn * c * 4
        vmem_limit = min(2 * x_tile_bytes + 4 * 1024 * 1024, 48 * 1024 * 1024)
        vmem_limit = max(vmem_limit, 16 * 1024 * 1024)

        partials = pl.pallas_call(
            kernel,
            out_shape=jax.ShapeDtypeStruct((grid_n, 8, 128), jnp.float32),
            grid_spec=pltpu.PrefetchScalarGridSpec(
                num_scalar_prefetch=0,
                grid=(grid_n,),
                in_specs=[
                    pl.BlockSpec((bn, c), lambda i: (i, 0)),
                    pl.BlockSpec((bn, 1), lambda i: (i, 0)),
                ],
                out_specs=pl.BlockSpec((1, 8, 128), lambda i: (i, 0, 0)),
            ),
            compiler_params=pltpu.CompilerParams(
                dimension_semantics=("parallel",),
                vmem_limit_bytes=int(vmem_limit),
            ),
        )(x, y2)

        # Final reduction (mean) in f32 in the wrapper.
        return jnp.sum(partials[:, 0, 0]) / jnp.float32(n)


def _reference(x, y, gamma=2.0):
    log_p = jax.nn.log_softmax(x, axis=-1)
    log_pt = jnp.take_along_axis(log_p, y[:, None], axis=-1)[:, 0]
    ce = -log_pt
    pt = jnp.exp(log_pt)
    return jnp.mean(((1.0 - pt) ** gamma) * ce)


if __name__ == "__main__":
    key = jax.random.PRNGKey(0)
    kx, ky = jax.random.split(key)

    N, C = 50, 32                       # N deliberately not a multiple of 8*k tiles
    x = jax.random.normal(kx, (N, C), dtype=jnp.float32)
    y = jax.random.randint(ky, (N,), 0, C, dtype=jnp.int32)

    loss_fn = MultiClassFocalLoss(alpha=1, gamma=2)
    loss = loss_fn(x, y)
    jax.block_until_ready(loss)

    ref = _reference(x, y, gamma=2.0)
    # Approx EUP reciprocal inside the kernel -> slightly looser tolerance.
    assert jnp.allclose(loss, ref, rtol=2e-3, atol=1e-5), (loss, ref)
    print("KERNEL_OK")
</pallas_src>

<mosaic_0001>
module attributes {stable_mosaic.version = 11 : i64} {
  func.func @_focal_loss_kernel(%arg0: i32, %arg1: memref<48x32xf32, #tpu.memory_space<vmem>>, %arg2: memref<48x1xi32, #tpu.memory_space<vmem>>, %arg3: memref<1x8x128xf32, #tpu.memory_space<vmem>>) attributes {dimension_semantics = [#tpu.dimension_semantics<parallel>], iteration_bounds = array<i64: 2>, scalar_prefetch = 0 : i64, scratch_operands = 0 : i64, tpu.core_type = #tpu.core_type<tc>, window_params = [{transform_indices = @transform_0, window_bounds = array<i64: 48, 32>}, {transform_indices = @transform_1, window_bounds = array<i64: 48, 1>}, {transform_indices = @transform_2, window_bounds = array<i64: 1, 8, 128>}]} {
    %c0 = arith.constant 0 : index
    %c0_0 = arith.constant 0 : index
    %0 = vector.load %arg1[%c0, %c0_0] : memref<48x32xf32, #tpu.memory_space<vmem>>, vector<48x32xf32>
    %c0_1 = arith.constant 0 : index
    %c0_2 = arith.constant 0 : index
    %1 = vector.load %arg2[%c0_1, %c0_2] : memref<48x1xi32, #tpu.memory_space<vmem>>, vector<48x1xi32>
    %2 = tpu.iota {dimensions = array<i32: 0>} : vector<48x1xi32>
    %c48_i32 = arith.constant 48 : i32
    %3 = arith.muli %arg0, %c48_i32 : i32
    %4 = vector.broadcast %3 : i32 to vector<48x1xi32>
    %5 = arith.addi %4, %2 : vector<48x1xi32>
    %c50_i32 = arith.constant 50 : i32
    %6 = vector.broadcast %c50_i32 : i32 to vector<48x1xi32>
    %7 = arith.cmpi slt, %5, %6 : vector<48x1xi32>
    %cst = arith.constant 0.000000e+00 : f32
    %8 = vector.shape_cast %7 : vector<48x1xi1> to vector<48x1xi1>
    %9 = vector.broadcast %8 : vector<48x1xi1> to vector<48x32xi1>
    %10 = vector.broadcast %cst : f32 to vector<48x32xf32>
    %11 = arith.select %9, %0, %10 : vector<48x32xi1>, vector<48x32xf32>
    %cst_3 = arith.constant dense<0xFF800000> : vector<48xf32>
    %12 = vector.multi_reduction <maximumf>, %11, %cst_3 [1] : vector<48x32xf32> to vector<48xf32>
    %13 = vector.shape_cast %12 : vector<48xf32> to vector<48x1xf32>
    %14 = vector.broadcast %13 : vector<48x1xf32> to vector<48x32xf32>
    %15 = arith.subf %11, %14 : vector<48x32xf32>
    %16 = math.exp %15 : vector<48x32xf32>
    %cst_4 = arith.constant dense<0.000000e+00> : vector<48xf32>
    %17 = vector.multi_reduction <add>, %16, %cst_4 [1] : vector<48x32xf32> to vector<48xf32>
    %18 = vector.shape_cast %17 : vector<48xf32> to vector<48x1xf32>
    %19 = math.log %18 : vector<48x1xf32>
    %20 = tpu.iota {dimensions = array<i32: 1>} : vector<48x32xi32>
    %21 = vector.broadcast %1 : vector<48x1xi32> to vector<48x32xi32>
    %22 = arith.cmpi eq, %20, %21 : vector<48x32xi32>
    %cst_5 = arith.constant 0.000000e+00 : f32
    %23 = vector.broadcast %cst_5 : f32 to vector<48x32xf32>
    %24 = arith.select %22, %15, %23 : vector<48x32xi1>, vector<48x32xf32>
    %cst_6 = arith.constant dense<0.000000e+00> : vector<48xf32>
    %25 = vector.multi_reduction <add>, %24, %cst_6 [1] : vector<48x32xf32> to vector<48xf32>
    %26 = vector.shape_cast %25 : vector<48xf32> to vector<48x1xf32>
    %cst_7 = arith.constant 0.000000e+00 : f32
    %27 = vector.broadcast %cst_7 : f32 to vector<48x32xf32>
    %28 = arith.select %22, %16, %27 : vector<48x32xi1>, vector<48x32xf32>
    %cst_8 = arith.constant dense<0.000000e+00> : vector<48xf32>
    %29 = vector.multi_reduction <add>, %28, %cst_8 [1] : vector<48x32xf32> to vector<48xf32>
    %30 = vector.shape_cast %29 : vector<48xf32> to vector<48x1xf32>
    %31 = arith.subf %19, %26 : vector<48x1xf32>
    %32 = tpu.reciprocal %18 {approx = true} : vector<48x1xf32> -> vector<48x1xf32>
    %33 = arith.mulf %30, %32 : vector<48x1xf32>
    %cst_9 = arith.constant 1.000000e+00 : f32
    %34 = vector.broadcast %cst_9 : f32 to vector<48x1xf32>
    %35 = arith.subf %34, %33 : vector<48x1xf32>
    %cst_10 = arith.constant 0.000000e+00 : f32
    %36 = vector.broadcast %cst_10 : f32 to vector<48x1xf32>
    %37 = arith.maximumf %35, %36 : vector<48x1xf32>
    %cst_11 = arith.constant 1.000000e+00 : f32
    %38 = vector.broadcast %cst_11 : f32 to vector<48x1xf32>
    %39 = arith.mulf %38, %37 : vector<48x1xf32>
    %40 = arith.mulf %39, %37 : vector<48x1xf32>
    %41 = arith.mulf %40, %31 : vector<48x1xf32>
    %42 = arith.extui %7 : vector<48x1xi1> to vector<48x1xi32>
    %43 = arith.sitofp %42 : vector<48x1xi32> to vector<48x1xf32>
    %44 = arith.mulf %41, %43 : vector<48x1xf32>
    %45 = vector.shape_cast %44 : vector<48x1xf32> to vector<1x48x1xf32>
    %cst_12 = arith.constant dense<0.000000e+00> : vector<1xf32>
    %46 = vector.multi_reduction <add>, %45, %cst_12 [1, 2] : vector<1x48x1xf32> to vector<1xf32>
    %47 = vector.shape_cast %46 : vector<1xf32> to vector<1x1x1xf32>
    %48 = vector.extract %47[0, 0, 0] : f32 from vector<1x1x1xf32>
    %49 = vector.broadcast %48 : f32 to vector<1x8x128xf32>
    %c0_13 = arith.constant 0 : index
    %c0_14 = arith.constant 0 : index
    %c0_15 = arith.constant 0 : index
    %50 = vector.load %arg3[%c0_13, %c0_14, %c0_15] : memref<1x8x128xf32, #tpu.memory_space<vmem>>, vector<1x8x128xf32>
    tpu.vector_store %arg3[%c0_13, %c0_14, %c0_15], %49 {strides = array<i32>} : memref<1x8x128xf32, #tpu.memory_space<vmem>>, vector<1x8x128xf32>,
    return
  }
  func.func @transform_0(%arg0: i32) -> (i32, i32) {
    %c0_i32 = arith.constant 0 : i32
    %c0_i32_0 = arith.constant 0 : i32
    return %arg0, %c0_i32 : i32, i32
  }
  func.func @transform_1(%arg0: i32) -> (i32, i32) {
    %c0_i32 = arith.constant 0 : i32
    %c0_i32_0 = arith.constant 0 : i32
    return %arg0, %c0_i32 : i32, i32
  }
  func.func @transform_2(%arg0: i32) -> (i32, i32, i32) {
    %c0_i32 = arith.constant 0 : i32
    %c0_i32_0 = arith.constant 0 : i32
    %c0_i32_1 = arith.constant 0 : i32
    return %arg0, %c0_i32, %c0_i32_0 : i32, i32, i32
  }
}

</mosaic_0001>

<llo_original>
// kernel: tpu_custom_call.1
$region0: #{tpu_custom_call.1}
  #allocation0 [shape = 'u32[]', space=smem, size = 0x4, offset = 0x4, fixed_abs, tag = 'smem constant byte address 0x4 - core index']
  #allocation1 [shape = 'u32[144,128]{1,0:T(1,128)}', space=vmem, size = 0x12000, scoped, tag = 'internal scratch']
  %s0 = inlined_call_operand.vmem [shape: f32[50,32], index: 0, kind: input, shape index: {}]
  %s1 = inlined_call_operand.vmem [shape: s32[50,1], index: 1, kind: input, shape index: {}]
  %s2 = inlined_call_operand.hbm [shape: f32[2,8,128], index: 2, kind: output, shape index: {}]
  %s3 = sld [smem:[#allocation0]]
  $region41: #{tpu_custom_call.1} parent=0
    _
  %s5 = ssub.s32 1, %s3
  %s6 = scalar_select 0, %s5, %s3
  $region1: #{tpu_custom_call.1} parent=0
    #allocation2 [shape = 'u8[8192]{0}', space=vmem, size = 0x2000, scoped, tag = 'output window, operand 0']
    #allocation3 [shape = 's32[2]{0}', space=sflag, size = 0x8, scoped, tag = 'scoped memory for tpu_custom_call.1']
    %7 = vsyncpa [#allocation3], 0
    %s8 = scalar_lea.sflag [#allocation3], 1
    %9 = vsyncpa %s8, 0
    loop: start=0, step=1, limit=4
    $region2: #{tpu_custom_call.1} parent=1 // loop_pre_header
      _
    $region3: #{tpu_custom_call.1} parent=1 // loop_header
      %s11 = sphi 0, %s15
      %p12 = scmp.ge.s32.totalorder %s11, 4
      %s21 = sphi 0, %s23
      %s24 = sphi 0, %s21
      %s25 = sphi 0, %s24
      %s41 = sphi 0, %s25
      %s47 = sphi 0, %s49
      %s50 = sphi 0, %s47
      %s51 = sphi 0, %s50
      %s67 = sphi 0, %s51
      %s73 = sphi 0, %s75
      %s76 = sphi 0, %s73
      %s77 = sphi 0, %s76
      %s93 = sphi 0, %s77
    $region4: #{tpu_custom_call.1} parent=1 // loop_header_branch
      %14 = sbr.rel (%p12) target = $region8
    $region5: #{tpu_custom_call.1} parent=1 // loop_body
      %s16 = ssub.s32 %s11, 1
      %s17 = ssub.s32 %s11, 2
      %s18 = sadd.s32 %s11, 1
      %s19 = ssub.s32 %s11, %s18
      %p20 = scmp.eq.s32.totalorder %s19, 0
      %s22 = sadd.s32 %s21, 1
      %s23 = scalar_select %p20, %s21, %s22
      %p26 = pneg %p20
      %p27 = scmp.eq.s32.totalorder %s11, 1
      %p28 = por %p26, %p27
      %p29 = scmp.ne.s32.totalorder %s21, %s24
      %p30 = scmp.eq.s32.totalorder %s11, 0
      %p31 = por %p29, %p30
      %p32 = scmp.ne.s32.totalorder %s21, %s24
      %p33 = scmp.eq.s32.totalorder %s16, 1
      %p34 = por %p32, %p33
      %p35 = scmp.ne.s32.totalorder %s24, %s25
      %p36 = scmp.eq.s32.totalorder %s16, 0
      %p37 = por %p35, %p36
      %p38 = scmp.ne.s32.totalorder %s24, %s25
      %p39 = scmp.eq.s32.totalorder %s17, 1
      %p40 = por %p38, %p39
      %p42 = scmp.ne.s32.totalorder %s25, %s41
      %p43 = scmp.eq.s32.totalorder %s17, 0
      %p44 = por %p42, %p43
      %s45 = ssub.s32 %s11, %s18
      %p46 = scmp.eq.s32.totalorder %s45, 0
      %s48 = sadd.s32 %s47, 1
      %s49 = scalar_select %p46, %s47, %s48
      %p52 = pneg %p46
      %p53 = scmp.eq.s32.totalorder %s11, 1
      %p54 = por %p52, %p53
      %p55 = scmp.ne.s32.totalorder %s47, %s50
      %p56 = scmp.eq.s32.totalorder %s11, 0
      %p57 = por %p55, %p56
      %p58 = scmp.ne.s32.totalorder %s47, %s50
      %p59 = scmp.eq.s32.totalorder %s16, 1
      %p60 = por %p58, %p59
      %p61 = scmp.ne.s32.totalorder %s50, %s51
      %p62 = scmp.eq.s32.totalorder %s16, 0
      %p63 = por %p61, %p62
      %p64 = scmp.ne.s32.totalorder %s50, %s51
      %p65 = scmp.eq.s32.totalorder %s17, 1
      %p66 = por %p64, %p65
      %p68 = scmp.ne.s32.totalorder %s51, %s67
      %p69 = scmp.eq.s32.totalorder %s17, 0
      %p70 = por %p68, %p69
      %s71 = ssub.s32 %s11, %s18
      %p72 = scmp.eq.s32.totalorder %s71, 0
      %s74 = sadd.s32 %s73, 1
      %s75 = scalar_select %p72, %s73, %s74
      %p78 = pneg %p72
      %p79 = scmp.eq.s32.totalorder %s11, 1
      %p80 = por %p78, %p79
      %p81 = scmp.ne.s32.totalorder %s73, %s76
      %p82 = scmp.eq.s32.totalorder %s11, 0
      %p83 = por %p81, %p82
      %p84 = scmp.ne.s32.totalorder %s73, %s76
      %p85 = scmp.eq.s32.totalorder %s16, 1
      %p86 = por %p84, %p85
      %p87 = scmp.ne.s32.totalorder %s76, %s77
      %p88 = scmp.eq.s32.totalorder %s16, 0
      %p89 = por %p87, %p88
      %p90 = scmp.ne.s32.totalorder %s76, %s77
      %p91 = scmp.eq.s32.totalorder %s17, 1
      %p92 = por %p90, %p91
      %p94 = scmp.ne.s32.totalorder %s77, %s93
      %p95 = scmp.eq.s32.totalorder %s17, 0
      %p96 = por %p94, %p95
      %p97 = scmp.le.s32.totalorder 1, %s11
      %p98 = scmp.lt.s32.totalorder %s11, 3
      %p99 = pnand %p97, %p98
      %p100 = pneg %p99
      // Predicated region
      $region9: #{tpu_custom_call.1} parent=5 // pred_check
        _
      $region10: #{tpu_custom_call.1} parent=5 // pred_check_branch
        %102 = sbr.rel (%p99) target = $region12
      $region11: #{tpu_custom_call.1} parent=5 // pred_region
        %s103 = ssub.s32 %s11, 1
      $region12: #{tpu_custom_call.1} parent=5 // pred_fallthru
        _
      %p104 = scmp.lt.s32.totalorder %s11, 2
      // Predicated region
      $region13: #{tpu_custom_call.1} parent=5 // pred_check
        %p105 = pneg %p104
      $region14: #{tpu_custom_call.1} parent=5 // pred_check_branch
        %107 = sbr.rel (%p105) target = $region16
      $region15: #{tpu_custom_call.1} parent=5 // pred_region
        // Predicated region
        $region17: #{tpu_custom_call.1} parent=15 // pred_check
          %p108 = pneg %p31
        $region18: #{tpu_custom_call.1} parent=15 // pred_check_branch
          %110 = sbr.rel (%p108) target = $region20
        $region19: #{tpu_custom_call.1} parent=15 // pred_region
          %s111 = smul.u32 6, %s11
          %s112 = ssub.s32 7, %s111
          %p113 = scmp.lt.s32.totalorder %s112, 6
          %s114 = scalar_select %p113, %s112, 6
          %s115 = smul.u32 128, %s114
          %p116 = scmp.lt.s32.totalorder %s111, 6
          %s117 = scalar_select %p116, %s111, 6
          %s118 = smul.addr %s117, 8
          %s119 = scalar_lea.vmem %s0, %s118
          %s120 = smul.u32 6, %s11
          %s121 = ssub.s32 7, %s120
          %p122 = scmp.lt.s32.totalorder %s121, 6
          %s123 = scalar_select %p122, %s121, 6
          %s124 = smul.u32 128, %s123
        $region20: #{tpu_custom_call.1} parent=15 // pred_fallthru
          _
        // Predicated region
        $region21: #{tpu_custom_call.1} parent=15 // pred_check
          %p125 = pneg %p57
        $region22: #{tpu_custom_call.1} parent=15 // pred_check_branch
          %127 = sbr.rel (%p125) target = $region24
        $region23: #{tpu_custom_call.1} parent=15 // pred_region
          %s128 = smul.u32 6, %s11
          %s129 = ssub.s32 7, %s128
          %p130 = scmp.lt.s32.totalorder %s129, 6
          %s131 = scalar_select %p130, %s129, 6
          %s132 = smul.u32 128, %s131
          %p133 = scmp.lt.s32.totalorder %s128, 6
          %s134 = scalar_select %p133, %s128, 6
          %s135 = smul.addr %s134, 8
          %s136 = scalar_lea.vmem %s1, %s135
          %s137 = smul.u32 6, %s11
          %s138 = ssub.s32 7, %s137
          %p139 = scmp.lt.s32.totalorder %s138, 6
          %s140 = scalar_select %p139, %s138, 6
          %s141 = smul.u32 128, %s140
        $region24: #{tpu_custom_call.1} parent=15 // pred_fallthru
          _
      $region16: #{tpu_custom_call.1} parent=5 // pred_fallthru
        _
      %p142 = scmp.le.s32.totalorder 1, %s11
      %p143 = scmp.lt.s32.totalorder %s11, 3
      %p144 = pnand %p142, %p143
      %p145 = pneg %p144
      // Predicated region
      $region25: #{tpu_custom_call.1} parent=5 // pred_check
        _
      $region26: #{tpu_custom_call.1} parent=5 // pred_check_branch
        %147 = sbr.rel (%p144) target = $region28
      $region27: #{tpu_custom_call.1} parent=5 // pred_region
        %s148 = ssub.s32 %s11, 1
        %s149 = smul.u32 6, %s16
        %s150 = ssub.s32 7, %s149
        %p151 = scmp.lt.s32.totalorder %s150, 6
        %s152 = scalar_select %p151, %s150, 6
        %s153 = smul.u32 128, %s152
        %p154 = scmp.lt.s32.totalorder %s149, 6
        %s155 = scalar_select %p154, %s149, 6
        %s156 = smul.addr %s155, 8
        %s157 = scalar_lea.vmem %s0, %s156
        %p158 = pneg %p37
        %p159 = pneg %p34
        %s160 = smul.u32 6, %s16
        %s161 = ssub.s32 7, %s160
        %p162 = scmp.lt.s32.totalorder %s161, 6
        %s163 = scalar_select %p162, %s161, 6
        %s164 = smul.u32 128, %s163
        %p165 = scmp.lt.s32.totalorder %s160, 6
        %s166 = scalar_select %p165, %s160, 6
        %s167 = smul.addr %s166, 8
        %s168 = scalar_lea.vmem %s1, %s167
        %p169 = pneg %p63
        %p170 = pneg %p60
        %p171 = pneg %p89
        %p172 = pneg %p86
        %s173 = sand.u32 %s76, 1
        %s174 = scalar_lea.sflag [#allocation3], %s173
        %s175 = sand.u32 %s76, 1
        %s176 = smul.addr %s175, 8
        %s177 = scalar_lea.vmem [#allocation2], %s176
        %s178 = smul.u32 6, %s16
        %s179 = ssub.s32 7, %s178
        %p180 = scmp.lt.s32.totalorder %s179, 6
        %s181 = scalar_select %p180, %s179, 6
        %s182 = smul.u32 128, %s181
        %p183 = scmp.lt.s32.totalorder %s178, 6
        %s184 = scalar_select %p183, %s178, 6
        %s185 = smul.addr %s184, 8
        %s186 = scalar_lea.vmem %s0, %s185
        %s187 = smul.u32 6, %s16
        %s188 = ssub.s32 7, %s187
        %p189 = scmp.lt.s32.totalorder %s188, 6
        %s190 = scalar_select %p189, %s188, 6
        %s191 = smul.u32 128, %s190
        %s192 = smul.u32 6, %s16
        %s193 = ssub.s32 7, %s192
        %p194 = scmp.lt.s32.totalorder %s193, 6
        %s195 = scalar_select %p194, %s193, 6
        %s196 = smul.u32 128, %s195
        %p197 = scmp.lt.s32.totalorder %s192, 6
        %s198 = scalar_select %p197, %s192, 6
        %s199 = smul.addr %s198, 8
        %s200 = scalar_lea.vmem %s1, %s199
        %s201 = smul.u32 6, %s16
        %s202 = ssub.s32 7, %s201
        %p203 = scmp.lt.s32.totalorder %s202, 6
        %s204 = scalar_select %p203, %s202, 6
        %s205 = smul.u32 128, %s204
        %v206 = vld [vmem:[%s186] sm:$0xff]
        %v207 = vld [vmem:[%s186 + $0x8] sm:$0xff]
        %v208 = vld [vmem:[%s186 + $0x10] sm:$0xff]
        %v209 = vld [vmem:[%s186 + $0x18] sm:$0xff]
        %v210 = vld [vmem:[%s186 + $0x20] sm:$0xff]
        %v211 = vld [vmem:[%s186 + $0x28] sm:$0xff]
        %v212 = vld [vmem:[%s200] sm:$0xff]
        %v213 = vld [vmem:[%s200 + $0x8] sm:$0xff]
        %v214 = vld [vmem:[%s200 + $0x10] sm:$0xff]
        %v215 = vld [vmem:[%s200 + $0x18] sm:$0xff]
        %v216 = vld [vmem:[%s200 + $0x20] sm:$0xff]
        %v217 = vld [vmem:[%s200 + $0x28] sm:$0xff]
        %v218 = vlaneseq
        %v219 = vshrl.u32 %v218, 7
        %v220 = vadd.s32 %v219, 8
        %v221 = vadd.s32 %v219, 16
        %v222 = vadd.s32 %v219, 24
        %v223 = vadd.s32 %v219, 32
        %v224 = vadd.s32 %v219, 40
        %s225 = smul.u32 %s16, 48
        %v226 = vstv %s225
        %v227 = vadd.s32 %v226, %v219
        %v228 = vadd.s32 %v226, %v220
        %v229 = vadd.s32 %v226, %v221
        %v230 = vadd.s32 %v226, %v222
        %v231 = vadd.s32 %v226, %v223
        %v232 = vadd.s32 %v226, %v224
        %vm233 = vcmp.lt.s32.totalorder %v227, 50
        %vm234 = vcmp.lt.s32.totalorder %v228, 50
        %vm235 = vcmp.lt.s32.totalorder %v229, 50
        %vm236 = vcmp.lt.s32.totalorder %v230, 50
        %vm237 = vcmp.lt.s32.totalorder %v231, 50
        %vm238 = vcmp.lt.s32.totalorder %v232, 50
        %v239 = vsel %vm233, 1, 0
        %v240 = vsel %vm234, 1, 0
        %v241 = vsel %vm235, 1, 0
        %v242 = vsel %vm236, 1, 0
        %v243 = vsel %vm237, 1, 0
        %v244 = vsel %vm238, 1, 0
        %vm245 = vcmp.eq.s32.totalorder %v239, 1
        %vm246 = vcmp.eq.s32.totalorder %v240, 1
        %vm247 = vcmp.eq.s32.totalorder %v241, 1
        %vm248 = vcmp.eq.s32.totalorder %v242, 1
        %vm249 = vcmp.eq.s32.totalorder %v243, 1
        %vm250 = vcmp.eq.s32.totalorder %v244, 1
        %v251 = vsel %vm245, %v206, 0.0
        %v252 = vsel %vm246, %v207, 0.0
        %v253 = vsel %vm247, %v208, 0.0
        %v254 = vsel %vm248, %v209, 0.0
        %v255 = vsel %vm249, %v210, 0.0
        %v256 = vsel %vm250, %v211, 0.0
        %vm257 = vcmask 261120
        %v258 = vsel %vm257, %v251, -inf
        %259 = vmax.xlane.f32.xlu0 %v258
        %v260 = vpop.xlane.xlu0 %259
        %v261 = vsel %vm257, %v252, -inf
        %262 = vmax.xlane.f32.xlu0 %v261
        %v263 = vpop.xlane.xlu0 %262
        %v264 = vsel %vm257, %v253, -inf
        %265 = vmax.xlane.f32.xlu0 %v264
        %v266 = vpop.xlane.xlu0 %265
        %v267 = vsel %vm257, %v254, -inf
        %268 = vmax.xlane.f32.xlu0 %v267
        %v269 = vpop.xlane.xlu0 %268
        %v270 = vsel %vm257, %v255, -inf
        %271 = vmax.xlane.f32.xlu0 %v270
        %v272 = vpop.xlane.xlu0 %271
        %v273 = vsel %vm257, %v256, -inf
        %274 = vmax.xlane.f32.xlu0 %v273
        %v275 = vpop.xlane.xlu0 %274
        %v276 = vsub.f32 %v251, %v260
        %v277 = vsub.f32 %v252, %v263
        %v278 = vsub.f32 %v253, %v266
        %v279 = vsub.f32 %v254, %v269
        %v280 = vsub.f32 %v255, %v272
        %v281 = vsub.f32 %v256, %v275
        %v282 = vmul.f32 %v276, 1.442695
        %v283 = vpow.pop %v282
        %v284 = vmul.f32 %v277, 1.442695
        %v285 = vpow.pop %v284
        %v286 = vmul.f32 %v278, 1.442695
        %v287 = vpow.pop %v286
        %v288 = vmul.f32 %v279, 1.442695
        %v289 = vpow.pop %v288
        %v290 = vmul.f32 %v280, 1.442695
        %v291 = vpow.pop %v290
        %v292 = vmul.f32 %v281, 1.442695
        %v293 = vpow.pop %v292
        %v294 = vsel %vm257, %v283, 0.0
        %295 = vadd.xlane.f32.xlu0 %v294
        %v296 = vpop.xlane.xlu0 %295
        %v297 = vsel %vm257, %v285, 0.0
        %298 = vadd.xlane.f32.xlu0 %v297
        %v299 = vpop.xlane.xlu0 %298
        %v300 = vsel %vm257, %v287, 0.0
        %301 = vadd.xlane.f32.xlu0 %v300
        %v302 = vpop.xlane.xlu0 %301
        %v303 = vsel %vm257, %v289, 0.0
        %304 = vadd.xlane.f32.xlu0 %v303
        %v305 = vpop.xlane.xlu0 %304
        %v306 = vsel %vm257, %v291, 0.0
        %307 = vadd.xlane.f32.xlu0 %v306
        %v308 = vpop.xlane.xlu0 %307
        %v309 = vsel %vm257, %v293, 0.0
        %310 = vadd.xlane.f32.xlu0 %v309
        %v311 = vpop.xlane.xlu0 %310
        %v312 = vlog2.pop %v296
        %v313 = vmul.f32 %v312, 0.6931472
        %v314 = vlog2.pop %v299
        %v315 = vmul.f32 %v314, 0.6931472
        %v316 = vlog2.pop %v302
        %v317 = vmul.f32 %v316, 0.6931472
        %v318 = vlog2.pop %v305
        %v319 = vmul.f32 %v318, 0.6931472
        %v320 = vlog2.pop %v308
        %v321 = vmul.f32 %v320, 0.6931472
        %v322 = vlog2.pop %v311
        %v323 = vmul.f32 %v322, 0.6931472
        %v324 = vlaneseq
        %v325 = vand.u32 %v324, 127
        %326 = vset.pattern.permute.xlu0 0
        %327 = vperm.xlu0 %326, %v212
        %v328 = vpop.permute.xlu0 %327
        %329 = vset.pattern.permute.xlu0 0
        %330 = vperm.xlu0 %329, %v213
        %v331 = vpop.permute.xlu0 %330
        %332 = vset.pattern.permute.xlu0 0
        %333 = vperm.xlu0 %332, %v214
        %v334 = vpop.permute.xlu0 %333
        %335 = vset.pattern.permute.xlu0 0
        %336 = vperm.xlu0 %335, %v215
        %v337 = vpop.permute.xlu0 %336
        %338 = vset.pattern.permute.xlu0 0
        %339 = vperm.xlu0 %338, %v216
        %v340 = vpop.permute.xlu0 %339
        %341 = vset.pattern.permute.xlu0 0
        %342 = vperm.xlu0 %341, %v217
        %v343 = vpop.permute.xlu0 %342
        %vm344 = vcmp.eq.s32.totalorder %v325, %v328
        %vm345 = vcmp.eq.s32.totalorder %v325, %v331
        %vm346 = vcmp.eq.s32.totalorder %v325, %v334
        %vm347 = vcmp.eq.s32.totalorder %v325, %v337
        %vm348 = vcmp.eq.s32.totalorder %v325, %v340
        %vm349 = vcmp.eq.s32.totalorder %v325, %v343
        %v350 = vsel %vm344, %v276, 0.0
        %v351 = vsel %vm345, %v277, 0.0
        %v352 = vsel %vm346, %v278, 0.0
        %v353 = vsel %vm347, %v279, 0.0
        %v354 = vsel %vm348, %v280, 0.0
        %v355 = vsel %vm349, %v281, 0.0
        %v356 = vsel %vm257, %v350, 0.0
        %357 = vadd.xlane.f32.xlu0 %v356
        %v358 = vpop.xlane.xlu0 %357
        %v359 = vsel %vm257, %v351, 0.0
        %360 = vadd.xlane.f32.xlu0 %v359
        %v361 = vpop.xlane.xlu0 %360
        %v362 = vsel %vm257, %v352, 0.0
        %363 = vadd.xlane.f32.xlu0 %v362
        %v364 = vpop.xlane.xlu0 %363
        %v365 = vsel %vm257, %v353, 0.0
        %366 = vadd.xlane.f32.xlu0 %v365
        %v367 = vpop.xlane.xlu0 %366
        %v368 = vsel %vm257, %v354, 0.0
        %369 = vadd.xlane.f32.xlu0 %v368
        %v370 = vpop.xlane.xlu0 %369
        %v371 = vsel %vm257, %v355, 0.0
        %372 = vadd.xlane.f32.xlu0 %v371
        %v373 = vpop.xlane.xlu0 %372
        %v374 = vsel %vm344, %v283, 0.0
        %v375 = vsel %vm345, %v285, 0.0
        %v376 = vsel %vm346, %v287, 0.0
        %v377 = vsel %vm347, %v289, 0.0
        %v378 = vsel %vm348, %v291, 0.0
        %v379 = vsel %vm349, %v293, 0.0
        %v380 = vsel %vm257, %v374, 0.0
        %381 = vadd.xlane.f32.xlu0 %v380
        %v382 = vpop.xlane.xlu0 %381
        %v383 = vsel %vm257, %v375, 0.0
        %384 = vadd.xlane.f32.xlu0 %v383
        %v385 = vpop.xlane.xlu0 %384
        %v386 = vsel %vm257, %v376, 0.0
        %387 = vadd.xlane.f32.xlu0 %v386
        %v388 = vpop.xlane.xlu0 %387
        %v389 = vsel %vm257, %v377, 0.0
        %390 = vadd.xlane.f32.xlu0 %v389
        %v391 = vpop.xlane.xlu0 %390
        %v392 = vsel %vm257, %v378, 0.0
        %393 = vadd.xlane.f32.xlu0 %v392
        %v394 = vpop.xlane.xlu0 %393
        %v395 = vsel %vm257, %v379, 0.0
        %396 = vadd.xlane.f32.xlu0 %v395
        %v397 = vpop.xlane.xlu0 %396
        %v398 = vsub.f32 %v313, %v358
        %v399 = vsub.f32 %v315, %v361
        %v400 = vsub.f32 %v317, %v364
        %v401 = vsub.f32 %v319, %v367
        %v402 = vsub.f32 %v321, %v370
        %v403 = vsub.f32 %v323, %v373
        %v404 = vrcp.pop %v296
        %v405 = vrcp.pop %v299
        %v406 = vrcp.pop %v302
        %v407 = vrcp.pop %v305
        %v408 = vrcp.pop %v308
        %v409 = vrcp.pop %v311
        %v410 = vmul.f32 %v382, %v404
        %v411 = vmul.f32 %v385, %v405
        %v412 = vmul.f32 %v388, %v406
        %v413 = vmul.f32 %v391, %v407
        %v414 = vmul.f32 %v394, %v408
        %v415 = vmul.f32 %v397, %v409
        %v416 = vsub.f32 1.0, %v410
        %v417 = vsub.f32 1.0, %v411
        %v418 = vsub.f32 1.0, %v412
        %v419 = vsub.f32 1.0, %v413
        %v420 = vsub.f32 1.0, %v414
        %v421 = vsub.f32 1.0, %v415
        %v422 = vmax.f32 %v416, 0.0
        %v423 = vmax.f32 %v417, 0.0
        %v424 = vmax.f32 %v418, 0.0
        %v425 = vmax.f32 %v419, 0.0
        %v426 = vmax.f32 %v420, 0.0
        %v427 = vmax.f32 %v421, 0.0
        %v428 = vmul.f32 %v422, %v422
        %v429 = vmul.f32 %v423, %v423
        %v430 = vmul.f32 %v424, %v424
        %v431 = vmul.f32 %v425, %v425
        %v432 = vmul.f32 %v426, %v426
        %v433 = vmul.f32 %v427, %v427
        %v434 = vmul.f32 %v428, %v398
        %v435 = vmul.f32 %v429, %v399
        %v436 = vmul.f32 %v430, %v400
        %v437 = vmul.f32 %v431, %v401
        %v438 = vmul.f32 %v432, %v402
        %v439 = vmul.f32 %v433, %v403
        %v440 = vcvt.s32.f32 %v239
        %v441 = vcvt.s32.f32 %v240
        %v442 = vcvt.s32.f32 %v241
        %v443 = vcvt.s32.f32 %v242
        %v444 = vcvt.s32.f32 %v243
        %v445 = vcvt.s32.f32 %v244
        %v446 = vmul.f32 %v434, %v440
        %v447 = vmul.f32 %v435, %v441
        %v448 = vmul.f32 %v436, %v442
        %v449 = vmul.f32 %v437, %v443
        %v450 = vmul.f32 %v438, %v444
        %v451 = vmul.f32 %v439, %v445
        %vm452 = vcmask 7168
        %v453 = vsel %vm452, %v446, 0.0
        %v454 = vsel %vm452, %v447, 0.0
        %v455 = vadd.f32 %v453, %v454
        %v456 = vsel %vm452, %v448, 0.0
        %v457 = vadd.f32 %v455, %v456
        %v458 = vsel %vm452, %v449, 0.0
        %v459 = vadd.f32 %v457, %v458
        %v460 = vsel %vm452, %v450, 0.0
        %v461 = vadd.f32 %v459, %v460
        %v462 = vsel %vm452, %v451, 0.0
        %v463 = vadd.f32 %v461, %v462
        %464 = vadd.xlane.f32.xlu0 %v463
        %v465 = vpop.xlane.xlu0 %464
        %v466 = vrot.slane %v465, 4
        %v467 = vadd.f32 %v465, %v466
        %v468 = vrot.slane %v467, 2
        %v469 = vadd.f32 %v467, %v468
        %v470 = vrot.slane %v469, 1
        %v471 = vadd.f32 %v469, %v470
        %s472 = vtos %v471
        %v473 = vstv %s472
        %474 = vst [vmem:[%s177] sm:$0xff] %v473
        %s475 = sand.u32 %s76, 1
        %s476 = scalar_lea.sflag [#allocation3], %s475
        %s477 = sand.u32 %s76, 1
        %s478 = smul.addr %s477, 8
        %s479 = scalar_lea.vmem [#allocation2], %s478
        // Predicated region
        $region29: #{tpu_custom_call.1} parent=27 // pred_check
          %p480 = pneg %p86
        $region30: #{tpu_custom_call.1} parent=27 // pred_check_branch
          %482 = sbr.rel (%p480) target = $region32
        $region31: #{tpu_custom_call.1} parent=27 // pred_region
          %s484 = ssub.s32 128, 128
          %485 = vsyncadd %s476, %s484
          %s486 = smul.addr %s16, 128
          %s487 = scalar_lea.hbm %s2, %s486
          %s489 = sshll.u32 %s479, 4
          %s490 = int_to_ptr.vmem [resolvable:$true] %s489
          %492 = dma.vmem_to_hbm [thread:$0]  %s490, 128, %s487, %s476
        $region32: #{tpu_custom_call.1} parent=27 // pred_fallthru
          _
      $region28: #{tpu_custom_call.1} parent=5 // pred_fallthru
        _
      %p493 = scmp.le.s32.totalorder 2, %s11
      // Predicated region
      $region33: #{tpu_custom_call.1} parent=5 // pred_check
        %p494 = pneg %p493
      $region34: #{tpu_custom_call.1} parent=5 // pred_check_branch
        %496 = sbr.rel (%p494) target = $region36
      $region35: #{tpu_custom_call.1} parent=5 // pred_region
        %s497 = ssub.s32 %s11, 2
        // Predicated region
        $region37: #{tpu_custom_call.1} parent=35 // pred_check
          %p498 = pneg %p92
        $region38: #{tpu_custom_call.1} parent=35 // pred_check_branch
          %500 = sbr.rel (%p498) target = $region40
        $region39: #{tpu_custom_call.1} parent=35 // pred_region
          %s501 = sand.u32 %s77, 1
          %s502 = scalar_lea.sflag [#allocation3], %s501
          %s503 = sand.u32 %s77, 1
          %s504 = smul.addr %s503, 8
          %s505 = scalar_lea.vmem [#allocation2], %s504
          %506 = dma.done %s502, 128
        $region40: #{tpu_custom_call.1} parent=35 // pred_fallthru
          _
      $region36: #{tpu_custom_call.1} parent=5 // pred_fallthru
        _
    $region6: #{tpu_custom_call.1} parent=1 // loop_footer
      %s15 = sadd.s32 1, %s11
    $region7: #{tpu_custom_call.1} parent=1 // loop_footer_branch
      %10 = sbr.rel target = $region3
    $region8: #{tpu_custom_call.1} parent=1 // loop_exit
      _
    %507 = vsyncpa [#allocation3], 1
    %s508 = scalar_lea.sflag [#allocation3], 1
    %509 = vsyncpa %s508, 1

</llo_original>
